<compile_context>
chip_gen: v7x
topology: tpu7x:2x2x1
jax: 0.10.0
libtpu: 0.0.40
codegen_flags: <defaults>
</compile_context>

<pallas_src>
import jax
import jax.numpy as jnp
from jax.experimental import pallas as pl
from jax.experimental.pallas import tpu as pltpu


def _round_up(x, m):
    return (x + m - 1) // m * m


def _make_kernel(alpha, beta):
    alpha = float(alpha)
    beta = float(beta)
    one_minus_beta = 1.0 - beta

    def kernel(a_ref, hl_ref, hprev_ref, h0_ref, wt_ref, b_ref, o_ref, m_acc):
        k = pl.program_id(1)

        @pl.when(k == 0)
        def _():
            m_acc[...] = jnp.zeros_like(m_acc)

        # streamed bf16 tiles, f32 accumulation on the MXU
        m_acc[...] += jnp.dot(
            a_ref[...], hl_ref[...], preferred_element_type=jnp.float32
        )

        @pl.when(k == pl.num_programs(1) - 1)
        def _():
            m = m_acc[...]
            # wt_ref / b_ref are pre-scaled by (1 - alpha) in the wrapper.
            wm = jnp.dot(m, wt_ref[...], preferred_element_type=jnp.float32) + b_ref[...]
            fused = (
                one_minus_beta * m
                + beta * h0_ref[...]
                + wm
                + alpha * hprev_ref[...]
            )
            o_ref[...] = jnp.maximum(fused, 0.0).astype(o_ref.dtype)

    return kernel


def _pad2(x, rows, cols, dtype):
    x = x.astype(dtype)
    pr, pc = rows - x.shape[0], cols - x.shape[1]
    if pr or pc:
        x = jnp.pad(x, ((0, pr), (0, pc)))
    return x


def resgcn_layer(A_hat, H_l, H_l_prev, H_0, W, b, alpha, beta, *, tm=512, tk=1024):
    """A_hat: [N,N]; H_*: [N,D]; W: [D,D] (torch Linear weight); b: [D]."""
    N, D = H_l.shape
    alpha = float(alpha)
    beta = float(beta)

    # clamp tile sizes for small graphs while keeping (8, 128) legality
    tm = min(tm, _round_up(N, 8))
    tk = min(tk, _round_up(N, 128))
    Nm = _round_up(N, tm)   # padded row extent
    Nk = _round_up(N, tk)   # padded reduction extent

    # Stream the big N x N adjacency and H_l in bf16 (halves HBM bytes on the
    # bandwidth-bound path); small residuals stay f32.
    A_p = _pad2(A_hat, Nm, Nk, jnp.bfloat16)
    Hl_p = _pad2(H_l, Nk, D, jnp.bfloat16)
    Hp_p = _pad2(H_l_prev, Nm, D, jnp.float32)
    H0_p = _pad2(H_0, Nm, D, jnp.float32)

    # Fold (1 - alpha) into the Linear parameters (saves a VPU mul per element).
    W_T = ((1.0 - alpha) * W.T).astype(jnp.float32)
    b2d = ((1.0 - alpha) * b).astype(jnp.float32).reshape(1, D)

    grid = (Nm // tm, Nk // tk)
    kernel = _make_kernel(alpha, beta)

    out = pl.pallas_call(
        kernel,
        out_shape=jax.ShapeDtypeStruct((Nm, D), jnp.float32),
        grid_spec=pltpu.PrefetchScalarGridSpec(
            num_scalar_prefetch=0,
            grid=grid,
            in_specs=[
                pl.BlockSpec((tm, tk), lambda i, k: (i, k)),   # A_hat tile (streamed)
                pl.BlockSpec((tk, D), lambda i, k: (k, 0)),    # H_l tile (streamed)
                pl.BlockSpec((tm, D), lambda i, k: (i, 0)),    # H_l_prev (resident over k)
                pl.BlockSpec((tm, D), lambda i, k: (i, 0)),    # H_0      (resident over k)
                pl.BlockSpec((D, D), lambda i, k: (0, 0)),     # W_T (fetched once)
                pl.BlockSpec((1, D), lambda i, k: (0, 0)),     # bias (fetched once)
            ],
            out_specs=pl.BlockSpec((tm, D), lambda i, k: (i, 0)),
            scratch_shapes=[pltpu.VMEM((tm, D), jnp.float32)],  # M accumulator
        ),
        compiler_params=pltpu.CompilerParams(
            dimension_semantics=("parallel", "arbitrary"),
            vmem_limit_bytes=64 * 1024 * 1024,
        ),
    )(A_p, Hl_p, Hp_p, H0_p, W_T, b2d)

    return out[:N, :]


def _reference(A_hat, H_l, H_l_prev, H_0, W, b, alpha, beta):
    # reference using the same bf16 quantization of the streamed operands
    A = A_hat.astype(jnp.bfloat16).astype(jnp.float32)
    Hl = H_l.astype(jnp.bfloat16).astype(jnp.float32)
    M = A @ Hl
    return jnp.maximum(
        (1.0 - beta) * M + beta * H_0
        + (1.0 - alpha) * (M @ W.T + b) + alpha * H_l_prev,
        0.0,
    )


def _run_case(key, N, D, alpha, beta, **tiles):
    k_a, k_hl, k_hp, k_h0, k_w, k_b = jax.random.split(key, 6)

    A_raw = jax.random.uniform(k_a, (N, N), dtype=jnp.float32)
    A_hat = A_raw / jnp.sum(A_raw, axis=-1, keepdims=True)

    H_l = jax.random.normal(k_hl, (N, D), dtype=jnp.float32)
    H_l_prev = jax.random.normal(k_hp, (N, D), dtype=jnp.float32)
    H_0 = jax.random.normal(k_h0, (N, D), dtype=jnp.float32)
    W = jax.random.normal(k_w, (D, D), dtype=jnp.float32) * (1.0 / jnp.sqrt(D))
    bvec = jax.random.normal(k_b, (D,), dtype=jnp.float32) * 0.01

    out = resgcn_layer(A_hat, H_l, H_l_prev, H_0, W, bvec, alpha, beta, **tiles)
    out = jax.block_until_ready(out)

    ref = _reference(A_hat, H_l, H_l_prev, H_0, W, bvec, alpha, beta)
    assert jnp.allclose(out, ref, atol=1e-3, rtol=1e-3), f"mismatch (N={N}, D={D})"

    # loose sanity check vs full-f32 math of the original module
    M = A_hat @ H_l
    ref_f32 = jnp.maximum(
        (1.0 - beta) * M + beta * H_0
        + (1.0 - alpha) * (M @ W.T + bvec) + alpha * H_l_prev,
        0.0,
    )
    assert jnp.allclose(out, ref_f32, atol=5e-2, rtol=5e-2), f"f32 drift (N={N}, D={D})"


if __name__ == "__main__":
    key = jax.random.PRNGKey(0)
    k1, k2 = jax.random.split(key)

    # small graph matching the module scale: 16 nodes, hidden dim 32
    _run_case(k1, N=16, D=32, alpha=0.1, beta=0.1)

    # multi-tile path: exercises row-tile parallel axis and k-reduction
    # accumulator (grid = (4, 2)) with small tiles
    _run_case(k2, N=256, D=32, alpha=0.1, beta=0.1, tm=64, tk=128)

    print("KERNEL_OK")
</pallas_src>

<mosaic_0001>
module attributes {stable_mosaic.version = 11 : i64} {
  func.func @kernel(%arg0: i32, %arg1: i32, %arg2: memref<16x128xbf16, #tpu.memory_space<vmem>>, %arg3: memref<128x32xbf16, #tpu.memory_space<vmem>>, %arg4: memref<16x32xf32, #tpu.memory_space<vmem>>, %arg5: memref<16x32xf32, #tpu.memory_space<vmem>>, %arg6: memref<32x32xf32, #tpu.memory_space<vmem>>, %arg7: memref<1x32xf32, #tpu.memory_space<vmem>>, %arg8: memref<16x32xf32, #tpu.memory_space<vmem>>, %arg9: memref<16x32xf32, #tpu.memory_space<vmem>>) attributes {dimension_semantics = [#tpu.dimension_semantics<parallel>, #tpu.dimension_semantics<arbitrary>], iteration_bounds = array<i64: 1, 1>, scalar_prefetch = 0 : i64, scratch_operands = 1 : i64, tpu.core_type = #tpu.core_type<tc>, window_params = [{transform_indices = @transform_0, window_bounds = array<i64: 16, 128>}, {transform_indices = @transform_1, window_bounds = array<i64: 128, 32>}, {transform_indices = @transform_2, window_bounds = array<i64: 16, 32>}, {transform_indices = @transform_3, window_bounds = array<i64: 16, 32>}, {pipeline_mode = #tpu.pipeline_mode<synchronous>, transform_indices = @transform_4, window_bounds = array<i64: 32, 32>}, {pipeline_mode = #tpu.pipeline_mode<synchronous>, transform_indices = @transform_5, window_bounds = array<i64: 1, 32>}, {transform_indices = @transform_6, window_bounds = array<i64: 16, 32>}]} {
    %c0_i32 = arith.constant 0 : i32
    %0 = arith.cmpi eq, %arg1, %c0_i32 : i32
    %1 = arith.extui %0 : i1 to i32
    %c0_i32_0 = arith.constant 0 : i32
    %2 = arith.cmpi ne, %1, %c0_i32_0 : i32
    scf.if %2 {
      %cst_10 = arith.constant 0.000000e+00 : f32
      %12 = vector.broadcast %cst_10 : f32 to vector<16x32xf32>
      %c0_11 = arith.constant 0 : index
      %c0_12 = arith.constant 0 : index
      %13 = vector.load %arg9[%c0_11, %c0_12] : memref<16x32xf32, #tpu.memory_space<vmem>>, vector<16x32xf32>
      tpu.vector_store %arg9[%c0_11, %c0_12], %12 {strides = array<i32>} : memref<16x32xf32, #tpu.memory_space<vmem>>, vector<16x32xf32>,
    } else {
    }
    %c0 = arith.constant 0 : index
    %c0_1 = arith.constant 0 : index
    %3 = vector.load %arg9[%c0, %c0_1] : memref<16x32xf32, #tpu.memory_space<vmem>>, vector<16x32xf32>
    %c0_2 = arith.constant 0 : index
    %c0_3 = arith.constant 0 : index
    %4 = vector.load %arg2[%c0_2, %c0_3] : memref<16x128xbf16, #tpu.memory_space<vmem>>, vector<16x128xbf16>
    %c0_4 = arith.constant 0 : index
    %c0_5 = arith.constant 0 : index
    %5 = vector.load %arg3[%c0_4, %c0_5] : memref<128x32xbf16, #tpu.memory_space<vmem>>, vector<128x32xbf16>
    %cst = arith.constant dense<0.000000e+00> : vector<16x32xf32>
    %6 = tpu.matmul %4, %5, %cst {dimension_numbers = #tpu.dot_dimension_numbers<[1], [0], [0], [1], [0, 0, 1, 1], [], []>} : vector<16x128xbf16>, vector<128x32xbf16>, vector<16x32xf32> -> vector<16x32xf32>
    %7 = arith.addf %3, %6 : vector<16x32xf32>
    %c0_6 = arith.constant 0 : index
    %c0_7 = arith.constant 0 : index
    %8 = vector.load %arg9[%c0_6, %c0_7] : memref<16x32xf32, #tpu.memory_space<vmem>>, vector<16x32xf32>
    tpu.vector_store %arg9[%c0_6, %c0_7], %7 {strides = array<i32>} : memref<16x32xf32, #tpu.memory_space<vmem>>, vector<16x32xf32>,
    %c0_i32_8 = arith.constant 0 : i32
    %9 = arith.cmpi eq, %arg1, %c0_i32_8 : i32
    %10 = arith.extui %9 : i1 to i32
    %c0_i32_9 = arith.constant 0 : i32
    %11 = arith.cmpi ne, %10, %c0_i32_9 : i32
    scf.if %11 {
      %c0_10 = arith.constant 0 : index
      %c0_11 = arith.constant 0 : index
      %12 = vector.load %arg9[%c0_10, %c0_11] : memref<16x32xf32, #tpu.memory_space<vmem>>, vector<16x32xf32>
      %c0_12 = arith.constant 0 : index
      %c0_13 = arith.constant 0 : index
      %13 = vector.load %arg6[%c0_12, %c0_13] : memref<32x32xf32, #tpu.memory_space<vmem>>, vector<32x32xf32>
      %cst_14 = arith.constant dense<0.000000e+00> : vector<16x32xf32>
      %14 = tpu.matmul %12, %13, %cst_14 {dimension_numbers = #tpu.dot_dimension_numbers<[1], [0], [0], [1], [0, 0, 1, 1], [], []>} : vector<16x32xf32>, vector<32x32xf32>, vector<16x32xf32> -> vector<16x32xf32>
      %c0_15 = arith.constant 0 : index
      %c0_16 = arith.constant 0 : index
      %15 = vector.load %arg7[%c0_15, %c0_16] : memref<1x32xf32, #tpu.memory_space<vmem>>, vector<1x32xf32>
      %16 = vector.broadcast %15 : vector<1x32xf32> to vector<16x32xf32>
      %17 = arith.addf %14, %16 : vector<16x32xf32>
      %cst_17 = arith.constant 0.899999976 : f32
      %18 = vector.broadcast %cst_17 : f32 to vector<16x32xf32>
      %19 = arith.mulf %18, %12 : vector<16x32xf32>
      %c0_18 = arith.constant 0 : index
      %c0_19 = arith.constant 0 : index
      %20 = vector.load %arg5[%c0_18, %c0_19] : memref<16x32xf32, #tpu.memory_space<vmem>>, vector<16x32xf32>
      %cst_20 = arith.constant 1.000000e-01 : f32
      %21 = vector.broadcast %cst_20 : f32 to vector<16x32xf32>
      %22 = arith.mulf %21, %20 : vector<16x32xf32>
      %23 = arith.addf %19, %22 : vector<16x32xf32>
      %24 = arith.addf %23, %17 : vector<16x32xf32>
      %c0_21 = arith.constant 0 : index
      %c0_22 = arith.constant 0 : index
      %25 = vector.load %arg4[%c0_21, %c0_22] : memref<16x32xf32, #tpu.memory_space<vmem>>, vector<16x32xf32>
      %cst_23 = arith.constant 1.000000e-01 : f32
      %26 = vector.broadcast %cst_23 : f32 to vector<16x32xf32>
      %27 = arith.mulf %26, %25 : vector<16x32xf32>
      %28 = arith.addf %24, %27 : vector<16x32xf32>
      %cst_24 = arith.constant 0.000000e+00 : f32
      %29 = vector.broadcast %cst_24 : f32 to vector<16x32xf32>
      %30 = arith.maximumf %28, %29 : vector<16x32xf32>
      %c0_25 = arith.constant 0 : index
      %c0_26 = arith.constant 0 : index
      %31 = vector.load %arg8[%c0_25, %c0_26] : memref<16x32xf32, #tpu.memory_space<vmem>>, vector<16x32xf32>
      tpu.vector_store %arg8[%c0_25, %c0_26], %30 {strides = array<i32>} : memref<16x32xf32, #tpu.memory_space<vmem>>, vector<16x32xf32>,
    } else {
    }
    return
  }
  func.func @transform_0(%arg0: i32, %arg1: i32) -> (i32, i32) {
    %c0_i32 = arith.constant 0 : i32
    return %arg0, %arg1 : i32, i32
  }
  func.func @transform_1(%arg0: i32, %arg1: i32) -> (i32, i32) {
    %c0_i32 = arith.constant 0 : i32
    %c0_i32_0 = arith.constant 0 : i32
    return %arg1, %c0_i32 : i32, i32
  }
  func.func @transform_2(%arg0: i32, %arg1: i32) -> (i32, i32) {
    %c0_i32 = arith.constant 0 : i32
    %c0_i32_0 = arith.constant 0 : i32
    return %arg0, %c0_i32 : i32, i32
  }
  func.func @transform_3(%arg0: i32, %arg1: i32) -> (i32, i32) {
    %c0_i32 = arith.constant 0 : i32
    %c0_i32_0 = arith.constant 0 : i32
    return %arg0, %c0_i32 : i32, i32
  }
  func.func @transform_4(%arg0: i32, %arg1: i32) -> (i32, i32) {
    %c0_i32 = arith.constant 0 : i32
    %c0_i32_0 = arith.constant 0 : i32
    %c0_i32_1 = arith.constant 0 : i32
    return %c0_i32, %c0_i32_0 : i32, i32
  }
  func.func @transform_5(%arg0: i32, %arg1: i32) -> (i32, i32) {
    %c0_i32 = arith.constant 0 : i32
    %c0_i32_0 = arith.constant 0 : i32
    %c0_i32_1 = arith.constant 0 : i32
    return %c0_i32, %c0_i32_0 : i32, i32
  }
  func.func @transform_6(%arg0: i32, %arg1: i32) -> (i32, i32) {
    %c0_i32 = arith.constant 0 : i32
    %c0_i32_0 = arith.constant 0 : i32
    return %arg0, %c0_i32 : i32, i32
  }
}

</mosaic_0001>

<llo_original>
// kernel: tpu_custom_call.1
$region0: #{tpu_custom_call.1}
  #allocation0 [shape = 'u32[]', space=smem, size = 0x4, offset = 0x4, fixed_abs, tag = 'smem constant byte address 0x4 - core index']
  #allocation1 [shape = 'u32[144,128]{1,0:T(1,128)}', space=vmem, size = 0x12000, scoped, tag = 'internal scratch']
  #allocation2 [shape = 'f32[16,32]{1,0:T(8,128)}', space=vmem, size = 0x2000, scoped, tag = 'scratch operand']
  %s0 = inlined_call_operand.hbm [shape: bf16[16,128], index: 0, kind: input, shape index: {}]
  %s1 = inlined_call_operand.hbm [shape: bf16[128,32], index: 1, kind: input, shape index: {}]
  %s2 = inlined_call_operand.hbm [shape: f32[16,32], index: 2, kind: input, shape index: {}]
  %s3 = inlined_call_operand.hbm [shape: f32[16,32], index: 3, kind: input, shape index: {}]
  %s4 = inlined_call_operand.hbm [shape: f32[32,32], index: 4, kind: input, shape index: {}]
  %s5 = inlined_call_operand.hbm [shape: f32[1,32], index: 5, kind: input, shape index: {}]
  %s6 = inlined_call_operand.hbm [shape: f32[16,32], index: 6, kind: output, shape index: {}]
  %s7 = sld [smem:[#allocation0]]
  $region66: #{tpu_custom_call.1} parent=0
    _
  %s9 = ssub.s32 1, %s7
  %s10 = scalar_select 0, %s9, %s7
  $region1: #{tpu_custom_call.1} parent=0
    #allocation3 [shape = 'u8[4096]{0}', space=vmem, size = 0x1000, scoped, tag = 'input window, operand 0, single buffered']
    #allocation4 [shape = 's32[1]{0}', space=sflag, size = 0x4, scoped, tag = 'scoped memory for tpu_custom_call.1']
    #allocation5 [shape = 's32[1]{0}', space=sflag, size = 0x4, scoped, tag = 'scoped memory for tpu_custom_call.1']
    #allocation6 [shape = 'u8[32768]{0}', space=vmem, size = 0x8000, scoped, tag = 'input window, operand 1, single buffered']
    #allocation7 [shape = 's32[1]{0}', space=sflag, size = 0x4, scoped, tag = 'scoped memory for tpu_custom_call.1']
    #allocation8 [shape = 'u8[8192]{0}', space=vmem, size = 0x2000, scoped, tag = 'input window, operand 2, single buffered']
    #allocation9 [shape = 'u8[8192]{0}', space=vmem, size = 0x2000, scoped, tag = 'input window, operand 3, single buffered']
    #allocation10 [shape = 's32[1]{0}', space=sflag, size = 0x4, scoped, tag = 'scoped memory for tpu_custom_call.1']
    #allocation11 [shape = 'u8[16384]{0}', space=vmem, size = 0x4000, scoped, tag = 'input window, operand 4, single buffered']
    #allocation12 [shape = 'u8[512]{0}', space=vmem, size = 0x400, scoped, tag = 'input window, operand 5, single buffered']
    #allocation13 [shape = 's32[1]{0}', space=sflag, size = 0x4, scoped, tag = 'scoped memory for tpu_custom_call.1']
    #allocation14 [shape = 'u8[8192]{0}', space=vmem, size = 0x2000, scoped, tag = 'output window, operand 0, single buffered']
    %11 = vsyncpa [#allocation4], 0
    %12 = vsyncpa [#allocation7], 0
    %13 = vsyncpa [#allocation10], 0
    %14 = vsyncpa [#allocation13], 0
    %15 = vsyncpa [#allocation5], 0
    // Predicated region
    $region2: #{tpu_custom_call.1} parent=1 // pred_check
      _
    $region3: #{tpu_custom_call.1} parent=1 // pred_check_branch
      %17 = sbr.rel (0) target = $region5
    $region4: #{tpu_custom_call.1} parent=1 // pred_region
      %s19 = ssub.s32 128, 128
      %20 = vsyncadd [#allocation4], %s19
      %s21 = sshll.u32 [#allocation3], 4
      %s22 = int_to_ptr.vmem [resolvable:$true] %s21
      %27 = dma.hbm_to_vmem [thread:$0]  %s0, 128, %s22, [#allocation4], 64, 64, 4
    $region5: #{tpu_custom_call.1} parent=1 // pred_fallthru
      _
    // Predicated region
    $region6: #{tpu_custom_call.1} parent=1 // pred_check
      _
    $region7: #{tpu_custom_call.1} parent=1 // pred_check_branch
      %29 = sbr.rel (0) target = $region9
    $region8: #{tpu_custom_call.1} parent=1 // pred_region
      %s31 = ssub.s32 1024, 1024
      %32 = vsyncadd [#allocation7], %s31
      %s33 = sshll.u32 [#allocation6], 4
      %s34 = int_to_ptr.vmem [resolvable:$true] %s33
      %39 = dma.hbm_to_vmem [thread:$0]  %s1, 1024, %s34, [#allocation7], 64, 64, 4
    $region9: #{tpu_custom_call.1} parent=1 // pred_fallthru
      _
    // Predicated region
    $region10: #{tpu_custom_call.1} parent=1 // pred_check
      _
    $region11: #{tpu_custom_call.1} parent=1 // pred_check_branch
      %41 = sbr.rel (0) target = $region13
    $region12: #{tpu_custom_call.1} parent=1 // pred_region
      %s43 = ssub.s32 256, 256
      %44 = vsyncadd [#allocation7], %s43
      %s45 = sshll.u32 [#allocation8], 4
      %s46 = int_to_ptr.vmem [resolvable:$true] %s45
      %51 = dma.hbm_to_vmem [thread:$0]  %s2, 256, %s46, [#allocation7], 128, 128, 8
    $region13: #{tpu_custom_call.1} parent=1 // pred_fallthru
      _
    // Predicated region
    $region14: #{tpu_custom_call.1} parent=1 // pred_check
      _
    $region15: #{tpu_custom_call.1} parent=1 // pred_check_branch
      %53 = sbr.rel (0) target = $region17
    $region16: #{tpu_custom_call.1} parent=1 // pred_region
      %s55 = ssub.s32 256, 256
      %56 = vsyncadd [#allocation10], %s55
      %s57 = sshll.u32 [#allocation9], 4
      %s58 = int_to_ptr.vmem [resolvable:$true] %s57
      %63 = dma.hbm_to_vmem [thread:$0]  %s3, 256, %s58, [#allocation10], 128, 128, 8
    $region17: #{tpu_custom_call.1} parent=1 // pred_fallthru
      _
    // Predicated region
    $region18: #{tpu_custom_call.1} parent=1 // pred_check
      _
    $region19: #{tpu_custom_call.1} parent=1 // pred_check_branch
      %65 = sbr.rel (0) target = $region21
    $region20: #{tpu_custom_call.1} parent=1 // pred_region
      %s67 = ssub.s32 512, 512
      %68 = vsyncadd [#allocation10], %s67
      %s69 = sshll.u32 [#allocation11], 4
      %s70 = int_to_ptr.vmem [resolvable:$true] %s69
      %75 = dma.hbm_to_vmem [thread:$0]  %s4, 512, %s70, [#allocation10], 128, 128, 8
    $region21: #{tpu_custom_call.1} parent=1 // pred_fallthru
      _
    // Predicated region
    $region22: #{tpu_custom_call.1} parent=1 // pred_check
      _
    $region23: #{tpu_custom_call.1} parent=1 // pred_check_branch
      %77 = sbr.rel (0) target = $region25
    $region24: #{tpu_custom_call.1} parent=1 // pred_region
      %s79 = ssub.s32 16, 16
      %80 = vsyncadd [#allocation13], %s79
      %s82 = sshll.u32 [#allocation12], 4
      %s83 = int_to_ptr.vmem [resolvable:$true] %s82
      %85 = dma.hbm_to_vmem [thread:$0]  %s5, 16, %s83, [#allocation13]
    $region25: #{tpu_custom_call.1} parent=1 // pred_fallthru
      _
    // Predicated region
    $region26: #{tpu_custom_call.1} parent=1 // pred_check
      _
    $region27: #{tpu_custom_call.1} parent=1 // pred_check_branch
      %87 = sbr.rel (0) target = $region29
    $region28: #{tpu_custom_call.1} parent=1 // pred_region
      %88 = dma.done [#allocation4], 128
    $region29: #{tpu_custom_call.1} parent=1 // pred_fallthru
      _
    // Predicated region
    $region30: #{tpu_custom_call.1} parent=1 // pred_check
      _
    $region31: #{tpu_custom_call.1} parent=1 // pred_check_branch
      %90 = sbr.rel (0) target = $region33
    $region32: #{tpu_custom_call.1} parent=1 // pred_region
      %91 = dma.done [#allocation7], 1024
    $region33: #{tpu_custom_call.1} parent=1 // pred_fallthru
      _
    // Predicated region
    $region34: #{tpu_custom_call.1} parent=1 // pred_check
      _
    $region35: #{tpu_custom_call.1} parent=1 // pred_check_branch
      %93 = sbr.rel (0) target = $region37
    $region36: #{tpu_custom_call.1} parent=1 // pred_region
      %94 = dma.done [#allocation7], 256
    $region37: #{tpu_custom_call.1} parent=1 // pred_fallthru
      _
    // Predicated region
    $region38: #{tpu_custom_call.1} parent=1 // pred_check
      _
    $region39: #{tpu_custom_call.1} parent=1 // pred_check_branch
      %96 = sbr.rel (0) target = $region41
    $region40: #{tpu_custom_call.1} parent=1 // pred_region
      %97 = dma.done [#allocation10], 256
    $region41: #{tpu_custom_call.1} parent=1 // pred_fallthru
      _
    // Predicated region
    $region42: #{tpu_custom_call.1} parent=1 // pred_check
      _
    $region43: #{tpu_custom_call.1} parent=1 // pred_check_branch
      %99 = sbr.rel (0) target = $region45
    $region44: #{tpu_custom_call.1} parent=1 // pred_region
      %100 = dma.done [#allocation10], 512
    $region45: #{tpu_custom_call.1} parent=1 // pred_fallthru
      _
    // Predicated region
    $region46: #{tpu_custom_call.1} parent=1 // pred_check
      _
    $region47: #{tpu_custom_call.1} parent=1 // pred_check_branch
      %102 = sbr.rel (0) target = $region49
    $region48: #{tpu_custom_call.1} parent=1 // pred_region
      %103 = dma.done [#allocation13], 16
    $region49: #{tpu_custom_call.1} parent=1 // pred_fallthru
      _
    %p105 = scmp.eq.s32.totalorder 0, 0
    // Predicated region
    $region50: #{tpu_custom_call.1} parent=1 // pred_check
      %p106 = pneg %p105
    $region51: #{tpu_custom_call.1} parent=1 // pred_check_branch
      %108 = sbr.rel (%p106) target = $region53
    $region52: #{tpu_custom_call.1} parent=1 // pred_region
      %vm109 = vcmask 261120
      %110 = vst.msk [vmem:[#allocation2] sm:$0xff] %vm109, 0.0
      %111 = vst.msk [vmem:[#allocation2 + $0x8] sm:$0xff] %vm109, 0.0
    $region53: #{tpu_custom_call.1} parent=1 // pred_fallthru
      _
    %v112 = vld [vmem:[#allocation2] sm:$0xff]
    %v113 = vld [vmem:[#allocation2 + $0x8] sm:$0xff]
    %v114 = vld [vmem:[#allocation3] sm:$0xf]
    %v115 = vld [vmem:[#allocation3 + $0x4] sm:$0xf]
    %v116 = vld [vmem:[#allocation6] sm:$0xf]
    %v117 = vld [vmem:[#allocation6 + $0x4] sm:$0xf]
    %v118 = vld [vmem:[#allocation6 + $0x8] sm:$0xf]
    %v119 = vld [vmem:[#allocation6 + $0xc] sm:$0xf]
    %v120 = vld [vmem:[#allocation6 + $0x10] sm:$0xf]
    %v121 = vld [vmem:[#allocation6 + $0x14] sm:$0xf]
    %v122 = vld [vmem:[#allocation6 + $0x18] sm:$0xf]
    %v123 = vld [vmem:[#allocation6 + $0x1c] sm:$0xf]
    %v124 = vld [vmem:[#allocation6 + $0x20] sm:$0xf]
    %v125 = vld [vmem:[#allocation6 + $0x24] sm:$0xf]
    %v126 = vld [vmem:[#allocation6 + $0x28] sm:$0xf]
    %v127 = vld [vmem:[#allocation6 + $0x2c] sm:$0xf]
    %v128 = vld [vmem:[#allocation6 + $0x30] sm:$0xf]
    %v129 = vld [vmem:[#allocation6 + $0x34] sm:$0xf]
    %v130 = vld [vmem:[#allocation6 + $0x38] sm:$0xf]
    %v131 = vld [vmem:[#allocation6 + $0x3c] sm:$0xf]
    %v134 = vunpack.c.l.b16 %v114
    %v135 = vunpack.c.l.b16 %v115
    %v136 = vpack.c.b16 %v135, %v134
    %v154 = vunpack.c.l.b16 %v116
    %v155 = vunpack.c.l.b16 %v117
    %v156 = vunpack.c.l.b16 %v118
    %v157 = vunpack.c.l.b16 %v119
    %v158 = vunpack.c.l.b16 %v120
    %v159 = vunpack.c.l.b16 %v121
    %v160 = vunpack.c.l.b16 %v122
    %v161 = vunpack.c.l.b16 %v123
    %v162 = vunpack.c.l.b16 %v124
    %v163 = vunpack.c.l.b16 %v125
    %v164 = vunpack.c.l.b16 %v126
    %v165 = vunpack.c.l.b16 %v127
    %v166 = vunpack.c.l.b16 %v128
    %v167 = vunpack.c.l.b16 %v129
    %v168 = vunpack.c.l.b16 %v130
    %v169 = vunpack.c.l.b16 %v131
    %v170 = vpack.c.b16 %v155, %v154
    %v171 = vpack.c.b16 %v157, %v156
    %v172 = vpack.c.b16 %v159, %v158
    %v173 = vpack.c.b16 %v161, %v160
    %v174 = vpack.c.b16 %v163, %v162
    %v175 = vpack.c.b16 %v165, %v164
    %v176 = vpack.c.b16 %v167, %v166
    %v177 = vpack.c.b16 %v169, %v168
    %186 = vmatprep.subr.bf16.mxu0 0
    %187 = vmatpush1.bf16.msra.mxu0 %v170
    %188 = vmatprep.subr.bf16.mxu0 0
    %189 = vmatpush1.bf16.msra.mxu0 %v171
    %190 = vmatprep.subr.bf16.mxu0 0
    %191 = vmatpush1.bf16.msra.mxu0 %v172
    %192 = vmatprep.subr.bf16.mxu0 0
    %193 = vmatpush1.bf16.msra.mxu0 %v173
    %194 = vmatprep.subr.bf16.mxu0 0
    %195 = vmatpush1.bf16.msra.mxu0 %v174
    %196 = vmatprep.subr.bf16.mxu0 0
    %197 = vmatpush1.bf16.msra.mxu0 %v175
    %198 = vmatprep.subr.bf16.mxu0 0
    %199 = vmatpush1.bf16.msra.mxu0 %v176
    %200 = vmatprep.subr.bf16.mxu0 0
    %201 = vmatpush1.bf16.msra.mxu0 %v177
    %202 = vmatprep.subr.bf16.mxu0 0
    %203 = vmatpush1.bf16.msra.mxu0 0
    %204 = vmatprep.subr.bf16.mxu0 0
    %205 = vmatpush1.bf16.msra.mxu0 0
    %206 = vmatprep.subr.bf16.mxu0 0
    %207 = vmatpush1.bf16.msra.mxu0 0
    %208 = vmatprep.subr.bf16.mxu0 0
    %209 = vmatpush1.bf16.msra.mxu0 0
    %210 = vmatprep.subr.bf16.mxu0 0
    %211 = vmatpush1.bf16.msra.mxu0 0
    %212 = vmatprep.subr.bf16.mxu0 0
    %213 = vmatpush1.bf16.msra.mxu0 0
    %214 = vmatprep.subr.bf16.mxu0 0
    %215 = vmatpush1.bf16.msra.mxu0 0
    %216 = vmatprep.subr.bf16.mxu0 0
    %217 = vmatpush1.bf16.msra.mxu0 0
    %218 = vmatprep.mubr.bf16.mxu0 0
    %219 = vmatmul.mubr.bf16.gmra.mrb[0].mxu0 %v136
    %v220 = vpop.f32.mrb[0].mxu0
    %v221 = vadd.f32 0.0, %v220
    %v222 = vpop.f32.mrb[0].mxu0
    %v223 = vpop.f32.mrb[0].mxu0
    %v224 = vadd.f32 0.0, %v223
    %v225 = vpop.f32.mrb[0].mxu0
    %226 = vdwg.mxu0
    %v227 = vadd.f32 %v112, %v221
    %v228 = vadd.f32 %v113, %v224
    %vm229 = vcmask 261120
    %230 = vst.msk [vmem:[#allocation2] sm:$0xff] %vm229, %v227
    %231 = vst.msk [vmem:[#allocation2 + $0x8] sm:$0xff] %vm229, %v228
    // Predicated region
    $region54: #{tpu_custom_call.1} parent=1 // pred_check
      %p232 = pneg %p105
    $region55: #{tpu_custom_call.1} parent=1 // pred_check_branch
      %234 = sbr.rel (%p232) target = $region57
    $region56: #{tpu_custom_call.1} parent=1 // pred_region
      %v235 = vld [vmem:[#allocation2] sm:$0xff]
      %v236 = vld [vmem:[#allocation2 + $0x8] sm:$0xff]
      %v237 = vld [vmem:[#allocation11] sm:$0xff]
      %v238 = vld [vmem:[#allocation11 + $0x8] sm:$0xff]
      %v239 = vld [vmem:[#allocation11 + $0x10] sm:$0xff]
      %v240 = vld [vmem:[#allocation11 + $0x18] sm:$0xff]
      %v241 = vld [vmem:[#allocation12] sm:$0x1]
      %v243 = vlaneseq
      %v244 = vshrl.u32 %v243, 7
      %v245 = vsub.s32 0, %v244
      %v246 = vrot.slane %v241, %v245
      %v249 = vsel %vm229, %v235, 0
      %v252 = vsel %vm229, %v236, 0
      %254 = vmatprep.subr.mxu0 0.0
      %255 = vmatpush1.msra.mxu0 %v237
      %256 = vmatprep.subr.mxu0 0.0
      %257 = vmatpush1.msra.mxu0 %v238
      %258 = vmatprep.subr.mxu0 0.0
      %259 = vmatpush1.msra.mxu0 %v239
      %260 = vmatprep.subr.mxu0 0.0
      %261 = vmatpush1.msra.mxu0 %v240
      %262 = vmatprep.subr.mxu0 0.0
      %263 = vmatpush1.msra.mxu0 0.0
      %264 = vmatprep.subr.mxu0 0.0
      %265 = vmatpush1.msra.mxu0 0.0
      %266 = vmatprep.subr.mxu0 0.0
      %267 = vmatpush1.msra.mxu0 0.0
      %268 = vmatprep.subr.mxu0 0.0
      %269 = vmatpush1.msra.mxu0 0.0
      %270 = vmatprep.subr.mxu0 0.0
      %271 = vmatpush1.msra.mxu0 0.0
      %272 = vmatprep.subr.mxu0 0.0
      %273 = vmatpush1.msra.mxu0 0.0
      %274 = vmatprep.subr.mxu0 0.0
      %275 = vmatpush1.msra.mxu0 0.0
      %276 = vmatprep.subr.mxu0 0.0
      %277 = vmatpush1.msra.mxu0 0.0
      %278 = vmatprep.subr.mxu0 0.0
      %279 = vmatpush1.msra.mxu0 0.0
      %280 = vmatprep.subr.mxu0 0.0
      %281 = vmatpush1.msra.mxu0 0.0
      %282 = vmatprep.subr.mxu0 0.0
      %283 = vmatpush1.msra.mxu0 0.0
      %284 = vmatprep.subr.mxu0 0.0
      %285 = vmatpush1.msra.mxu0 0.0
      %286 = vmatprep.subr.mxu0 0.0
      %287 = vmatpush1.msra.mxu0 0.0
      %288 = vmatprep.subr.mxu0 0.0
      %289 = vmatpush1.msra.mxu0 0.0
      %290 = vmatprep.subr.mxu0 0.0
      %291 = vmatpush1.msra.mxu0 0.0
      %292 = vmatprep.subr.mxu0 0.0
      %293 = vmatpush1.msra.mxu0 0.0
      %294 = vmatprep.subr.mxu0 0.0
      %295 = vmatpush1.msra.mxu0 0.0
      %296 = vmatprep.subr.mxu0 0.0
      %297 = vmatpush1.msra.mxu0 0.0
      %298 = vmatprep.subr.mxu0 0.0
      %299 = vmatpush1.msra.mxu0 0.0
      %300 = vmatprep.subr.mxu0 0.0
      %301 = vmatpush1.msra.mxu0 0.0
      %302 = vmatprep.subr.mxu0 0.0
      %303 = vmatpush1.msra.mxu0 0.0
      %304 = vmatprep.subr.mxu0 0.0
      %305 = vmatpush1.msra.mxu0 0.0
      %306 = vmatprep.subr.mxu0 0.0
      %307 = vmatpush1.msra.mxu0 0.0
      %308 = vmatprep.subr.mxu0 0.0
      %309 = vmatpush1.msra.mxu0 0.0
      %310 = vmatprep.subr.mxu0 0.0
      %311 = vmatpush1.msra.mxu0 0.0
      %312 = vmatprep.subr.mxu0 0.0
      %313 = vmatpush1.msra.mxu0 0.0
      %314 = vmatprep.subr.mxu0 0.0
      %315 = vmatpush1.msra.mxu0 0.0
      %316 = vmatprep.subr.mxu0 0.0
      %317 = vmatpush1.msra.mxu0 0.0
      %318 = vmatprep.mubr.f32.mxu0 0.0
      %319 = vmatmul.mubr.f32.gmra.mrb[0].mxu0 %v249
      %v320 = vpop.f32.mrb[0].mxu0
      %v321 = vadd.f32 %v246, %v320
      %v322 = vpop.f32.mrb[0].mxu0
      %323 = vmatprep.mubr.f32.mxu0 0.0
      %324 = vmatmul.mubr.f32.gmra.mrb[0].mxu0 %v252
      %v325 = vpop.f32.mrb[0].mxu0
      %v326 = vadd.f32 %v246, %v325
      %v327 = vpop.f32.mrb[0].mxu0
      %328 = vdwg.mxu0
      %v329 = vmul.f32 %v235, 0.9
      %v330 = vmul.f32 %v236, 0.9
      %v331 = vld [vmem:[#allocation9] sm:$0xff]
      %v332 = vld [vmem:[#allocation9 + $0x8] sm:$0xff]
      %v333 = vmul.f32 %v331, 0.1
      %v334 = vmul.f32 %v332, 0.1
      %v335 = vadd.f32 %v329, %v333
      %v336 = vadd.f32 %v330, %v334
      %v337 = vadd.f32 %v335, %v321
      %v338 = vadd.f32 %v336, %v326
      %v339 = vld [vmem:[#allocation8] sm:$0xff]
      %v340 = vld [vmem:[#allocation8 + $0x8] sm:$0xff]
      %v341 = vmul.f32 %v339, 0.1
      %v342 = vmul.f32 %v340, 0.1
      %v343 = vadd.f32 %v337, %v341
      %v344 = vadd.f32 %v338, %v342
      %v345 = vmax.f32 %v343, 0.0
      %v346 = vmax.f32 %v344, 0.0
      %347 = vst.msk [vmem:[#allocation14] sm:$0xff] %vm229, %v345
      %348 = vst.msk [vmem:[#allocation14 + $0x8] sm:$0xff] %vm229, %v346
    $region57: #{tpu_custom_call.1} parent=1 // pred_fallthru
      _
    // Predicated region
    $region58: #{tpu_custom_call.1} parent=1 // pred_check
      _
    $region59: #{tpu_custom_call.1} parent=1 // pred_check_branch
      %350 = sbr.rel (0) target = $region61
    $region60: #{tpu_custom_call.1} parent=1 // pred_region
      %s352 = ssub.s32 256, 256
      %353 = vsyncadd [#allocation5], %s352
      %s354 = sshll.u32 [#allocation14], 4
      %s355 = int_to_ptr.vmem [resolvable:$true] %s354
      %360 = dma.vmem_to_hbm [thread:$0]  %s355, 256, %s6, [#allocation5], 128, 128, 8
    $region61: #{tpu_custom_call.1} parent=1 // pred_fallthru
      _
    // Predicated region
    $region62: #{tpu_custom_call.1} parent=1 // pred_check
      _
    $region63: #{tpu_custom_call.1} parent=1 // pred_check_branch
      %362 = sbr.rel (0) target = $region65
    $region64: #{tpu_custom_call.1} parent=1 // pred_region
      %363 = dma.done [#allocation5], 256
    $region65: #{tpu_custom_call.1} parent=1 // pred_fallthru
      _
    %364 = vsyncpa [#allocation4], 1
    %365 = vsyncpa [#allocation7], 1
    %366 = vsyncpa [#allocation10], 1
    %367 = vsyncpa [#allocation13], 1
    %368 = vsyncpa [#allocation5], 1

</llo_original>
